<compile_context>
chip_gen: v7x
topology: tpu7x:2x2x1
jax: 0.10.0
libtpu: 0.0.40
codegen_flags: <defaults>
</compile_context>

<pallas_src>
import functools

import jax
import jax.numpy as jnp
from jax.experimental import pallas as pl
from jax.experimental.pallas import tpu as pltpu


# ----------------------------------------------------------------------------
# Kernel
# ----------------------------------------------------------------------------
def _unet_conv2_kernel(x_ref, w1_ref, b1_ref, w2_ref, b2_ref, o_ref,
                       *, H, W, Cout):
    """Fused conv1(3x3,valid)+BN+ReLU -> conv2(3x3,valid)+BN+ReLU, one image.

    x_ref : (1, Cin, H*W)     bf16, row-major flattened image (no padding)
    w1_ref: (9*Cout, Cin)     bf16, rows tap-major (t = 3*dy+dx), BN scale folded
    b1_ref: (Cout, 1)         f32, folded conv-bias + BN bias
    w2_ref: (9*Cout, Cout)    bf16
    b2_ref: (Cout, 1)         f32
    o_ref : (1, Cout, H-4, W-4)
    """
    HW = H * W

    def conv3x3_full_width(w_all, rhs):
        # One MXU matmul for all 9 taps, then accumulate lane-rolled partials.
        # rhs columns are flat spatial positions; tap (dy,dx) must contribute
        # partial[:, c + dy*W + dx] to output column c, i.e. a lane roll by
        # -(dy*W + dx).  Roll wrap-around only touches flat columns that never
        # feed a kept (H-4, W-4) output, so no slack padding is needed.
        p = jnp.dot(w_all, rhs, preferred_element_type=jnp.float32)  # (9*Cout, HW)
        acc = None
        for dy in range(3):
            for dx in range(3):
                t = 3 * dy + dx
                k = dy * W + dx
                part = p[t * Cout:(t + 1) * Cout, :]        # sublane-aligned slice
                if k:
                    part = pltpu.roll(part, HW - k, 1)      # XLU lane rotation
                acc = part if acc is None else acc + part
        return acc                                          # (Cout, HW) f32

    xf = x_ref[0]                                           # (Cin, HW) bf16
    h = jnp.maximum(conv3x3_full_width(w1_ref[...], xf) + b1_ref[...], 0.0)
    h = h.astype(w2_ref.dtype)                              # bf16 for the MXU
    y = jnp.maximum(conv3x3_full_width(w2_ref[...], h) + b2_ref[...], 0.0)

    # Compact the valid window (rows < H-4, flat cols with c % W < W-4) straight
    # into the output block: no full-width HBM write + wrapper slice round-trip.
    for r in range(H - 4):
        o_ref[0, :, r, :] = y[:, r * W:r * W + (W - 4)].astype(o_ref.dtype)


# ----------------------------------------------------------------------------
# Wrapper
# ----------------------------------------------------------------------------
@functools.partial(jax.jit, static_argnames=("is_batchnorm", "compute_dtype"))
def unet_conv2_forward(x_nchw, params, is_batchnorm=True,
                       compute_dtype=jnp.bfloat16):
    """unetConv2.forward (eval-mode BN): NCHW in -> NCHW out (H-4, W-4)."""
    N, Cin, H, W = x_nchw.shape
    Cout = params["w1"].shape[0]
    # Full-width conv trick: kept outputs never read wrapped/garbage columns
    # only when both spatial dims are >= 5 (3x3 valid conv applied twice).
    assert H >= 5 and W >= 5, "unet_conv2_forward requires H, W >= 5"

    eps = 1e-5
    if is_batchnorm:
        s1 = params["g1"] / jnp.sqrt(params["v1"] + eps)
        s2 = params["g2"] / jnp.sqrt(params["v2"] + eps)
        w1 = params["w1"] * s1[:, None, None, None]          # fold BN scale
        w2 = params["w2"] * s2[:, None, None, None]
        b1 = (params["b1"] - params["m1"]) * s1 + params["beta1"]
        b2 = (params["b2"] - params["m2"]) * s2 + params["beta2"]
    else:
        w1, b1 = params["w1"], params["b1"]
        w2, b2 = params["w2"], params["b2"]

    # OIHW -> (kh, kw, O, I) -> (9*O, I): tap-major rows matching the kernel.
    w1m = jnp.transpose(w1, (2, 3, 0, 1)).reshape(9 * Cout, Cin).astype(compute_dtype)
    w2m = jnp.transpose(w2, (2, 3, 0, 1)).reshape(9 * Cout, Cout).astype(compute_dtype)
    b1c = b1.reshape(Cout, 1).astype(jnp.float32)
    b2c = b2.reshape(Cout, 1).astype(jnp.float32)

    # Row-major spatial flatten (free) + bf16 cast (halves input HBM traffic).
    # NOTE: no jnp.pad — the kernel needs no slack columns.
    xflat = x_nchw.reshape(N, Cin, H * W).astype(compute_dtype)

    out = pl.pallas_call(
        functools.partial(_unet_conv2_kernel, H=H, W=W, Cout=Cout),
        out_shape=jax.ShapeDtypeStruct((N, Cout, H - 4, W - 4), x_nchw.dtype),
        grid=(N,),
        in_specs=[
            pl.BlockSpec((1, Cin, H * W), lambda n: (n, 0, 0)),
            pl.BlockSpec((9 * Cout, Cin), lambda n: (0, 0)),
            pl.BlockSpec((Cout, 1), lambda n: (0, 0)),
            pl.BlockSpec((9 * Cout, Cout), lambda n: (0, 0)),
            pl.BlockSpec((Cout, 1), lambda n: (0, 0)),
        ],
        out_specs=pl.BlockSpec((1, Cout, H - 4, W - 4), lambda n: (n, 0, 0, 0)),
        compiler_params=pltpu.CompilerParams(
            dimension_semantics=("parallel",)),   # batch -> 2 TCs on v7x
    )(xflat, w1m, b1c, w2m, b2c)
    return out


# ----------------------------------------------------------------------------
# Pure-JAX reference (correctness check only)
# ----------------------------------------------------------------------------
def reference_forward(x_nchw, params, eps=1e-5):
    dn = ("NCHW", "OIHW", "NCHW")

    def block(inp, w, cb, g, bt, m, v):
        y = jax.lax.conv_general_dilated(inp, w, (1, 1), "VALID",
                                         dimension_numbers=dn)
        s = g / jnp.sqrt(v + eps)
        return jnp.maximum(y * s.reshape(1, -1, 1, 1)
                           + ((cb - m) * s + bt).reshape(1, -1, 1, 1), 0.0)

    h = block(x_nchw, params["w1"], params["b1"], params["g1"],
              params["beta1"], params["m1"], params["v1"])
    return block(h, params["w2"], params["b2"], params["g2"],
                 params["beta2"], params["m2"], params["v2"])


# ----------------------------------------------------------------------------
if __name__ == "__main__":
    in_size, out_size = 4, 8
    N, H, W = 2, 16, 16  # conv1 -> 14x14, conv2 -> 12x12

    key = jax.random.PRNGKey(0)
    ks = jax.random.split(key, 13)

    params = {
        # conv weights in PyTorch OIHW layout (cout, cin, kh, kw)
        "w1": 0.1 * jax.random.normal(ks[0], (out_size, in_size, 3, 3), jnp.float32),
        "b1": 0.1 * jax.random.normal(ks[1], (out_size,), jnp.float32),
        "g1": 1.0 + 0.1 * jax.random.normal(ks[2], (out_size,), jnp.float32),
        "beta1": 0.1 * jax.random.normal(ks[3], (out_size,), jnp.float32),
        "m1": 0.05 * jax.random.normal(ks[4], (out_size,), jnp.float32),
        "v1": 0.5 + jnp.abs(jax.random.normal(ks[5], (out_size,), jnp.float32)),

        "w2": 0.1 * jax.random.normal(ks[6], (out_size, out_size, 3, 3), jnp.float32),
        "b2": 0.1 * jax.random.normal(ks[7], (out_size,), jnp.float32),
        "g2": 1.0 + 0.1 * jax.random.normal(ks[8], (out_size,), jnp.float32),
        "beta2": 0.1 * jax.random.normal(ks[9], (out_size,), jnp.float32),
        "m2": 0.05 * jax.random.normal(ks[10], (out_size,), jnp.float32),
        "v2": 0.5 + jnp.abs(jax.random.normal(ks[11], (out_size,), jnp.float32)),
    }

    x = jax.random.normal(ks[12], (N, in_size, H, W), jnp.float32)

    out = unet_conv2_forward(x, params)
    out = jax.block_until_ready(out)

    ref = reference_forward(x, params)

    assert out.shape == (N, out_size, H - 4, W - 4), out.shape
    # bf16 operands + f32 accumulation vs. pure-f32 reference -> loose tolerance.
    assert jnp.allclose(out, ref, atol=3e-2, rtol=3e-2), (
        float(jnp.max(jnp.abs(out - ref))))

    print("KERNEL_OK")
</pallas_src>

<mosaic_0001>
module attributes {stable_mosaic.version = 11 : i64} {
  func.func @_unet_conv2_kernel(%arg0: i32, %arg1: memref<1x4x256xbf16, #tpu.memory_space<vmem>>, %arg2: memref<72x4xbf16, #tpu.memory_space<vmem>>, %arg3: memref<8x1xf32, #tpu.memory_space<vmem>>, %arg4: memref<72x8xbf16, #tpu.memory_space<vmem>>, %arg5: memref<8x1xf32, #tpu.memory_space<vmem>>, %arg6: memref<1x8x12x12xf32, #tpu.memory_space<vmem>>) attributes {dimension_semantics = [#tpu.dimension_semantics<parallel>], iteration_bounds = array<i64: 2>, scalar_prefetch = 0 : i64, scratch_operands = 0 : i64, tpu.core_type = #tpu.core_type<tc>, window_params = [{transform_indices = @transform_0, window_bounds = array<i64: 1, 4, 256>}, {pipeline_mode = #tpu.pipeline_mode<synchronous>, transform_indices = @transform_1, window_bounds = array<i64: 72, 4>}, {pipeline_mode = #tpu.pipeline_mode<synchronous>, transform_indices = @transform_2, window_bounds = array<i64: 8, 1>}, {pipeline_mode = #tpu.pipeline_mode<synchronous>, transform_indices = @transform_3, window_bounds = array<i64: 72, 8>}, {pipeline_mode = #tpu.pipeline_mode<synchronous>, transform_indices = @transform_4, window_bounds = array<i64: 8, 1>}, {transform_indices = @transform_5, window_bounds = array<i64: 1, 8, 12, 12>}]} {
    %c0 = arith.constant 0 : index
    %c0_0 = arith.constant 0 : index
    %c0_1 = arith.constant 0 : index
    %0 = vector.load %arg1[%c0, %c0_0, %c0_1] : memref<1x4x256xbf16, #tpu.memory_space<vmem>>, vector<1x4x256xbf16>
    %1 = vector.shape_cast %0 : vector<1x4x256xbf16> to vector<4x256xbf16>
    %c0_2 = arith.constant 0 : index
    %c0_3 = arith.constant 0 : index
    %2 = vector.load %arg2[%c0_2, %c0_3] : memref<72x4xbf16, #tpu.memory_space<vmem>>, vector<72x4xbf16>
    %cst = arith.constant dense<0.000000e+00> : vector<72x256xf32>
    %3 = tpu.matmul %2, %1, %cst {dimension_numbers = #tpu.dot_dimension_numbers<[1], [0], [0], [1], [0, 0, 1, 1], [], []>} : vector<72x4xbf16>, vector<4x256xbf16>, vector<72x256xf32> -> vector<72x256xf32>
    %4 = vector.extract_strided_slice %3 {offsets = [0, 0], sizes = [8, 256], strides = [1, 1]} : vector<72x256xf32> to vector<8x256xf32>
    %5 = vector.extract_strided_slice %3 {offsets = [8, 0], sizes = [8, 256], strides = [1, 1]} : vector<72x256xf32> to vector<8x256xf32>
    %c255_i32 = arith.constant 255 : i32
    %6 = tpu.dynamic_rotate %5 by %c255_i32 dim 1 : vector<8x256xf32>, i32 -> vector<8x256xf32>
    %7 = arith.addf %4, %6 : vector<8x256xf32>
    %8 = vector.extract_strided_slice %3 {offsets = [16, 0], sizes = [8, 256], strides = [1, 1]} : vector<72x256xf32> to vector<8x256xf32>
    %c254_i32 = arith.constant 254 : i32
    %9 = tpu.dynamic_rotate %8 by %c254_i32 dim 1 : vector<8x256xf32>, i32 -> vector<8x256xf32>
    %10 = arith.addf %7, %9 : vector<8x256xf32>
    %11 = vector.extract_strided_slice %3 {offsets = [24, 0], sizes = [8, 256], strides = [1, 1]} : vector<72x256xf32> to vector<8x256xf32>
    %c240_i32 = arith.constant 240 : i32
    %12 = tpu.dynamic_rotate %11 by %c240_i32 dim 1 : vector<8x256xf32>, i32 -> vector<8x256xf32>
    %13 = arith.addf %10, %12 : vector<8x256xf32>
    %14 = vector.extract_strided_slice %3 {offsets = [32, 0], sizes = [8, 256], strides = [1, 1]} : vector<72x256xf32> to vector<8x256xf32>
    %c239_i32 = arith.constant 239 : i32
    %15 = tpu.dynamic_rotate %14 by %c239_i32 dim 1 : vector<8x256xf32>, i32 -> vector<8x256xf32>
    %16 = arith.addf %13, %15 : vector<8x256xf32>
    %17 = vector.extract_strided_slice %3 {offsets = [40, 0], sizes = [8, 256], strides = [1, 1]} : vector<72x256xf32> to vector<8x256xf32>
    %c238_i32 = arith.constant 238 : i32
    %18 = tpu.dynamic_rotate %17 by %c238_i32 dim 1 : vector<8x256xf32>, i32 -> vector<8x256xf32>
    %19 = arith.addf %16, %18 : vector<8x256xf32>
    %20 = vector.extract_strided_slice %3 {offsets = [48, 0], sizes = [8, 256], strides = [1, 1]} : vector<72x256xf32> to vector<8x256xf32>
    %c224_i32 = arith.constant 224 : i32
    %21 = tpu.dynamic_rotate %20 by %c224_i32 dim 1 : vector<8x256xf32>, i32 -> vector<8x256xf32>
    %22 = arith.addf %19, %21 : vector<8x256xf32>
    %23 = vector.extract_strided_slice %3 {offsets = [56, 0], sizes = [8, 256], strides = [1, 1]} : vector<72x256xf32> to vector<8x256xf32>
    %c223_i32 = arith.constant 223 : i32
    %24 = tpu.dynamic_rotate %23 by %c223_i32 dim 1 : vector<8x256xf32>, i32 -> vector<8x256xf32>
    %25 = arith.addf %22, %24 : vector<8x256xf32>
    %26 = vector.extract_strided_slice %3 {offsets = [64, 0], sizes = [8, 256], strides = [1, 1]} : vector<72x256xf32> to vector<8x256xf32>
    %c222_i32 = arith.constant 222 : i32
    %27 = tpu.dynamic_rotate %26 by %c222_i32 dim 1 : vector<8x256xf32>, i32 -> vector<8x256xf32>
    %28 = arith.addf %25, %27 : vector<8x256xf32>
    %c0_4 = arith.constant 0 : index
    %c0_5 = arith.constant 0 : index
    %29 = vector.load %arg3[%c0_4, %c0_5] : memref<8x1xf32, #tpu.memory_space<vmem>>, vector<8x1xf32>
    %30 = vector.broadcast %29 : vector<8x1xf32> to vector<8x256xf32>
    %31 = arith.addf %28, %30 : vector<8x256xf32>
    %cst_6 = arith.constant 0.000000e+00 : f32
    %32 = vector.broadcast %cst_6 : f32 to vector<8x256xf32>
    %33 = arith.maximumf %31, %32 : vector<8x256xf32>
    %34 = arith.truncf %33 : vector<8x256xf32> to vector<8x256xbf16>
    %c0_7 = arith.constant 0 : index
    %c0_8 = arith.constant 0 : index
    %35 = vector.load %arg4[%c0_7, %c0_8] : memref<72x8xbf16, #tpu.memory_space<vmem>>, vector<72x8xbf16>
    %cst_9 = arith.constant dense<0.000000e+00> : vector<72x256xf32>
    %36 = tpu.matmul %35, %34, %cst_9 {dimension_numbers = #tpu.dot_dimension_numbers<[1], [0], [0], [1], [0, 0, 1, 1], [], []>} : vector<72x8xbf16>, vector<8x256xbf16>, vector<72x256xf32> -> vector<72x256xf32>
    %37 = vector.extract_strided_slice %36 {offsets = [0, 0], sizes = [8, 256], strides = [1, 1]} : vector<72x256xf32> to vector<8x256xf32>
    %38 = vector.extract_strided_slice %36 {offsets = [8, 0], sizes = [8, 256], strides = [1, 1]} : vector<72x256xf32> to vector<8x256xf32>
    %c255_i32_10 = arith.constant 255 : i32
    %39 = tpu.dynamic_rotate %38 by %c255_i32_10 dim 1 : vector<8x256xf32>, i32 -> vector<8x256xf32>
    %40 = arith.addf %37, %39 : vector<8x256xf32>
    %41 = vector.extract_strided_slice %36 {offsets = [16, 0], sizes = [8, 256], strides = [1, 1]} : vector<72x256xf32> to vector<8x256xf32>
    %c254_i32_11 = arith.constant 254 : i32
    %42 = tpu.dynamic_rotate %41 by %c254_i32_11 dim 1 : vector<8x256xf32>, i32 -> vector<8x256xf32>
    %43 = arith.addf %40, %42 : vector<8x256xf32>
    %44 = vector.extract_strided_slice %36 {offsets = [24, 0], sizes = [8, 256], strides = [1, 1]} : vector<72x256xf32> to vector<8x256xf32>
    %c240_i32_12 = arith.constant 240 : i32
    %45 = tpu.dynamic_rotate %44 by %c240_i32_12 dim 1 : vector<8x256xf32>, i32 -> vector<8x256xf32>
    %46 = arith.addf %43, %45 : vector<8x256xf32>
    %47 = vector.extract_strided_slice %36 {offsets = [32, 0], sizes = [8, 256], strides = [1, 1]} : vector<72x256xf32> to vector<8x256xf32>
    %c239_i32_13 = arith.constant 239 : i32
    %48 = tpu.dynamic_rotate %47 by %c239_i32_13 dim 1 : vector<8x256xf32>, i32 -> vector<8x256xf32>
    %49 = arith.addf %46, %48 : vector<8x256xf32>
    %50 = vector.extract_strided_slice %36 {offsets = [40, 0], sizes = [8, 256], strides = [1, 1]} : vector<72x256xf32> to vector<8x256xf32>
    %c238_i32_14 = arith.constant 238 : i32
    %51 = tpu.dynamic_rotate %50 by %c238_i32_14 dim 1 : vector<8x256xf32>, i32 -> vector<8x256xf32>
    %52 = arith.addf %49, %51 : vector<8x256xf32>
    %53 = vector.extract_strided_slice %36 {offsets = [48, 0], sizes = [8, 256], strides = [1, 1]} : vector<72x256xf32> to vector<8x256xf32>
    %c224_i32_15 = arith.constant 224 : i32
    %54 = tpu.dynamic_rotate %53 by %c224_i32_15 dim 1 : vector<8x256xf32>, i32 -> vector<8x256xf32>
    %55 = arith.addf %52, %54 : vector<8x256xf32>
    %56 = vector.extract_strided_slice %36 {offsets = [56, 0], sizes = [8, 256], strides = [1, 1]} : vector<72x256xf32> to vector<8x256xf32>
    %c223_i32_16 = arith.constant 223 : i32
    %57 = tpu.dynamic_rotate %56 by %c223_i32_16 dim 1 : vector<8x256xf32>, i32 -> vector<8x256xf32>
    %58 = arith.addf %55, %57 : vector<8x256xf32>
    %59 = vector.extract_strided_slice %36 {offsets = [64, 0], sizes = [8, 256], strides = [1, 1]} : vector<72x256xf32> to vector<8x256xf32>
    %c222_i32_17 = arith.constant 222 : i32
    %60 = tpu.dynamic_rotate %59 by %c222_i32_17 dim 1 : vector<8x256xf32>, i32 -> vector<8x256xf32>
    %61 = arith.addf %58, %60 : vector<8x256xf32>
    %c0_18 = arith.constant 0 : index
    %c0_19 = arith.constant 0 : index
    %62 = vector.load %arg5[%c0_18, %c0_19] : memref<8x1xf32, #tpu.memory_space<vmem>>, vector<8x1xf32>
    %63 = vector.broadcast %62 : vector<8x1xf32> to vector<8x256xf32>
    %64 = arith.addf %61, %63 : vector<8x256xf32>
    %cst_20 = arith.constant 0.000000e+00 : f32
    %65 = vector.broadcast %cst_20 : f32 to vector<8x256xf32>
    %66 = arith.maximumf %64, %65 : vector<8x256xf32>
    %67 = vector.extract_strided_slice %66 {offsets = [0, 0], sizes = [8, 12], strides = [1, 1]} : vector<8x256xf32> to vector<8x12xf32>
    %c0_21 = arith.constant 0 : index
    %c0_22 = arith.constant 0 : index
    %c0_23 = arith.constant 0 : index
    %c0_24 = arith.constant 0 : index
    %68 = vector.load %arg6[%c0_21, %c0_22, %c0_23, %c0_24] : memref<1x8x12x12xf32, #tpu.memory_space<vmem>>, vector<1x8x1x12xf32>
    %69 = vector.shape_cast %68 : vector<1x8x1x12xf32> to vector<8x12xf32>
    %70 = vector.shape_cast %67 : vector<8x12xf32> to vector<1x8x1x12xf32>
    tpu.vector_store %arg6[%c0_21, %c0_22, %c0_23, %c0_24], %70 {strides = array<i32>} : memref<1x8x12x12xf32, #tpu.memory_space<vmem>>, vector<1x8x1x12xf32>,
    %71 = vector.extract_strided_slice %66 {offsets = [0, 16], sizes = [8, 12], strides = [1, 1]} : vector<8x256xf32> to vector<8x12xf32>
    %c0_25 = arith.constant 0 : index
    %c0_26 = arith.constant 0 : index
    %c1 = arith.constant 1 : index
    %c0_27 = arith.constant 0 : index
    %72 = vector.load %arg6[%c0_25, %c0_26, %c1, %c0_27] : memref<1x8x12x12xf32, #tpu.memory_space<vmem>>, vector<1x8x1x12xf32>
    %73 = vector.shape_cast %72 : vector<1x8x1x12xf32> to vector<8x12xf32>
    %74 = vector.shape_cast %71 : vector<8x12xf32> to vector<1x8x1x12xf32>
    tpu.vector_store %arg6[%c0_25, %c0_26, %c1, %c0_27], %74 {strides = array<i32>} : memref<1x8x12x12xf32, #tpu.memory_space<vmem>>, vector<1x8x1x12xf32>,
    %75 = vector.extract_strided_slice %66 {offsets = [0, 32], sizes = [8, 12], strides = [1, 1]} : vector<8x256xf32> to vector<8x12xf32>
    %c0_28 = arith.constant 0 : index
    %c0_29 = arith.constant 0 : index
    %c2 = arith.constant 2 : index
    %c0_30 = arith.constant 0 : index
    %76 = vector.load %arg6[%c0_28, %c0_29, %c2, %c0_30] : memref<1x8x12x12xf32, #tpu.memory_space<vmem>>, vector<1x8x1x12xf32>
    %77 = vector.shape_cast %76 : vector<1x8x1x12xf32> to vector<8x12xf32>
    %78 = vector.shape_cast %75 : vector<8x12xf32> to vector<1x8x1x12xf32>
    tpu.vector_store %arg6[%c0_28, %c0_29, %c2, %c0_30], %78 {strides = array<i32>} : memref<1x8x12x12xf32, #tpu.memory_space<vmem>>, vector<1x8x1x12xf32>,
    %79 = vector.extract_strided_slice %66 {offsets = [0, 48], sizes = [8, 12], strides = [1, 1]} : vector<8x256xf32> to vector<8x12xf32>
    %c0_31 = arith.constant 0 : index
    %c0_32 = arith.constant 0 : index
    %c3 = arith.constant 3 : index
    %c0_33 = arith.constant 0 : index
    %80 = vector.load %arg6[%c0_31, %c0_32, %c3, %c0_33] : memref<1x8x12x12xf32, #tpu.memory_space<vmem>>, vector<1x8x1x12xf32>
    %81 = vector.shape_cast %80 : vector<1x8x1x12xf32> to vector<8x12xf32>
    %82 = vector.shape_cast %79 : vector<8x12xf32> to vector<1x8x1x12xf32>
    tpu.vector_store %arg6[%c0_31, %c0_32, %c3, %c0_33], %82 {strides = array<i32>} : memref<1x8x12x12xf32, #tpu.memory_space<vmem>>, vector<1x8x1x12xf32>,
    %83 = vector.extract_strided_slice %66 {offsets = [0, 64], sizes = [8, 12], strides = [1, 1]} : vector<8x256xf32> to vector<8x12xf32>
    %c0_34 = arith.constant 0 : index
    %c0_35 = arith.constant 0 : index
    %c4 = arith.constant 4 : index
    %c0_36 = arith.constant 0 : index
    %84 = vector.load %arg6[%c0_34, %c0_35, %c4, %c0_36] : memref<1x8x12x12xf32, #tpu.memory_space<vmem>>, vector<1x8x1x12xf32>
    %85 = vector.shape_cast %84 : vector<1x8x1x12xf32> to vector<8x12xf32>
    %86 = vector.shape_cast %83 : vector<8x12xf32> to vector<1x8x1x12xf32>
    tpu.vector_store %arg6[%c0_34, %c0_35, %c4, %c0_36], %86 {strides = array<i32>} : memref<1x8x12x12xf32, #tpu.memory_space<vmem>>, vector<1x8x1x12xf32>,
    %87 = vector.extract_strided_slice %66 {offsets = [0, 80], sizes = [8, 12], strides = [1, 1]} : vector<8x256xf32> to vector<8x12xf32>
    %c0_37 = arith.constant 0 : index
    %c0_38 = arith.constant 0 : index
    %c5 = arith.constant 5 : index
    %c0_39 = arith.constant 0 : index
    %88 = vector.load %arg6[%c0_37, %c0_38, %c5, %c0_39] : memref<1x8x12x12xf32, #tpu.memory_space<vmem>>, vector<1x8x1x12xf32>
    %89 = vector.shape_cast %88 : vector<1x8x1x12xf32> to vector<8x12xf32>
    %90 = vector.shape_cast %87 : vector<8x12xf32> to vector<1x8x1x12xf32>
    tpu.vector_store %arg6[%c0_37, %c0_38, %c5, %c0_39], %90 {strides = array<i32>} : memref<1x8x12x12xf32, #tpu.memory_space<vmem>>, vector<1x8x1x12xf32>,
    %91 = vector.extract_strided_slice %66 {offsets = [0, 96], sizes = [8, 12], strides = [1, 1]} : vector<8x256xf32> to vector<8x12xf32>
    %c0_40 = arith.constant 0 : index
    %c0_41 = arith.constant 0 : index
    %c6 = arith.constant 6 : index
    %c0_42 = arith.constant 0 : index
    %92 = vector.load %arg6[%c0_40, %c0_41, %c6, %c0_42] : memref<1x8x12x12xf32, #tpu.memory_space<vmem>>, vector<1x8x1x12xf32>
    %93 = vector.shape_cast %92 : vector<1x8x1x12xf32> to vector<8x12xf32>
    %94 = vector.shape_cast %91 : vector<8x12xf32> to vector<1x8x1x12xf32>
    tpu.vector_store %arg6[%c0_40, %c0_41, %c6, %c0_42], %94 {strides = array<i32>} : memref<1x8x12x12xf32, #tpu.memory_space<vmem>>, vector<1x8x1x12xf32>,
    %95 = vector.extract_strided_slice %66 {offsets = [0, 112], sizes = [8, 12], strides = [1, 1]} : vector<8x256xf32> to vector<8x12xf32>
    %c0_43 = arith.constant 0 : index
    %c0_44 = arith.constant 0 : index
    %c7 = arith.constant 7 : index
    %c0_45 = arith.constant 0 : index
    %96 = vector.load %arg6[%c0_43, %c0_44, %c7, %c0_45] : memref<1x8x12x12xf32, #tpu.memory_space<vmem>>, vector<1x8x1x12xf32>
    %97 = vector.shape_cast %96 : vector<1x8x1x12xf32> to vector<8x12xf32>
    %98 = vector.shape_cast %95 : vector<8x12xf32> to vector<1x8x1x12xf32>
    tpu.vector_store %arg6[%c0_43, %c0_44, %c7, %c0_45], %98 {strides = array<i32>} : memref<1x8x12x12xf32, #tpu.memory_space<vmem>>, vector<1x8x1x12xf32>,
    %99 = vector.extract_strided_slice %66 {offsets = [0, 128], sizes = [8, 12], strides = [1, 1]} : vector<8x256xf32> to vector<8x12xf32>
    %c0_46 = arith.constant 0 : index
    %c0_47 = arith.constant 0 : index
    %c8 = arith.constant 8 : index
    %c0_48 = arith.constant 0 : index
    %100 = vector.load %arg6[%c0_46, %c0_47, %c8, %c0_48] : memref<1x8x12x12xf32, #tpu.memory_space<vmem>>, vector<1x8x1x12xf32>
    %101 = vector.shape_cast %100 : vector<1x8x1x12xf32> to vector<8x12xf32>
    %102 = vector.shape_cast %99 : vector<8x12xf32> to vector<1x8x1x12xf32>
    tpu.vector_store %arg6[%c0_46, %c0_47, %c8, %c0_48], %102 {strides = array<i32>} : memref<1x8x12x12xf32, #tpu.memory_space<vmem>>, vector<1x8x1x12xf32>,
    %103 = vector.extract_strided_slice %66 {offsets = [0, 144], sizes = [8, 12], strides = [1, 1]} : vector<8x256xf32> to vector<8x12xf32>
    %c0_49 = arith.constant 0 : index
    %c0_50 = arith.constant 0 : index
    %c9 = arith.constant 9 : index
    %c0_51 = arith.constant 0 : index
    %104 = vector.load %arg6[%c0_49, %c0_50, %c9, %c0_51] : memref<1x8x12x12xf32, #tpu.memory_space<vmem>>, vector<1x8x1x12xf32>
    %105 = vector.shape_cast %104 : vector<1x8x1x12xf32> to vector<8x12xf32>
    %106 = vector.shape_cast %103 : vector<8x12xf32> to vector<1x8x1x12xf32>
    tpu.vector_store %arg6[%c0_49, %c0_50, %c9, %c0_51], %106 {strides = array<i32>} : memref<1x8x12x12xf32, #tpu.memory_space<vmem>>, vector<1x8x1x12xf32>,
    %107 = vector.extract_strided_slice %66 {offsets = [0, 160], sizes = [8, 12], strides = [1, 1]} : vector<8x256xf32> to vector<8x12xf32>
    %c0_52 = arith.constant 0 : index
    %c0_53 = arith.constant 0 : index
    %c10 = arith.constant 10 : index
    %c0_54 = arith.constant 0 : index
    %108 = vector.load %arg6[%c0_52, %c0_53, %c10, %c0_54] : memref<1x8x12x12xf32, #tpu.memory_space<vmem>>, vector<1x8x1x12xf32>
    %109 = vector.shape_cast %108 : vector<1x8x1x12xf32> to vector<8x12xf32>
    %110 = vector.shape_cast %107 : vector<8x12xf32> to vector<1x8x1x12xf32>
    tpu.vector_store %arg6[%c0_52, %c0_53, %c10, %c0_54], %110 {strides = array<i32>} : memref<1x8x12x12xf32, #tpu.memory_space<vmem>>, vector<1x8x1x12xf32>,
    %111 = vector.extract_strided_slice %66 {offsets = [0, 176], sizes = [8, 12], strides = [1, 1]} : vector<8x256xf32> to vector<8x12xf32>
    %c0_55 = arith.constant 0 : index
    %c0_56 = arith.constant 0 : index
    %c11 = arith.constant 11 : index
    %c0_57 = arith.constant 0 : index
    %112 = vector.load %arg6[%c0_55, %c0_56, %c11, %c0_57] : memref<1x8x12x12xf32, #tpu.memory_space<vmem>>, vector<1x8x1x12xf32>
    %113 = vector.shape_cast %112 : vector<1x8x1x12xf32> to vector<8x12xf32>
    %114 = vector.shape_cast %111 : vector<8x12xf32> to vector<1x8x1x12xf32>
    tpu.vector_store %arg6[%c0_55, %c0_56, %c11, %c0_57], %114 {strides = array<i32>} : memref<1x8x12x12xf32, #tpu.memory_space<vmem>>, vector<1x8x1x12xf32>,
    return
  }
  func.func @transform_0(%arg0: i32) -> (i32, i32, i32) {
    %c0_i32 = arith.constant 0 : i32
    %c0_i32_0 = arith.constant 0 : i32
    %c0_i32_1 = arith.constant 0 : i32
    return %arg0, %c0_i32, %c0_i32_0 : i32, i32, i32
  }
  func.func @transform_1(%arg0: i32) -> (i32, i32) {
    %c0_i32 = arith.constant 0 : i32
    %c0_i32_0 = arith.constant 0 : i32
    %c0_i32_1 = arith.constant 0 : i32
    return %c0_i32, %c0_i32_0 : i32, i32
  }
  func.func @transform_2(%arg0: i32) -> (i32, i32) {
    %c0_i32 = arith.constant 0 : i32
    %c0_i32_0 = arith.constant 0 : i32
    %c0_i32_1 = arith.constant 0 : i32
    return %c0_i32, %c0_i32_0 : i32, i32
  }
  func.func @transform_3(%arg0: i32) -> (i32, i32) {
    %c0_i32 = arith.constant 0 : i32
    %c0_i32_0 = arith.constant 0 : i32
    %c0_i32_1 = arith.constant 0 : i32
    return %c0_i32, %c0_i32_0 : i32, i32
  }
  func.func @transform_4(%arg0: i32) -> (i32, i32) {
    %c0_i32 = arith.constant 0 : i32
    %c0_i32_0 = arith.constant 0 : i32
    %c0_i32_1 = arith.constant 0 : i32
    return %c0_i32, %c0_i32_0 : i32, i32
  }
  func.func @transform_5(%arg0: i32) -> (i32, i32, i32, i32) {
    %c0_i32 = arith.constant 0 : i32
    %c0_i32_0 = arith.constant 0 : i32
    %c0_i32_1 = arith.constant 0 : i32
    %c0_i32_2 = arith.constant 0 : i32
    return %arg0, %c0_i32, %c0_i32_0, %c0_i32_1 : i32, i32, i32, i32
  }
}

</mosaic_0001>

<llo_original>
// kernel: unet_conv2_forward.1
$region0: #{unet_conv2_forward.1}
  #allocation0 [shape = 'u32[]', space=smem, size = 0x4, offset = 0x4, fixed_abs, tag = 'smem constant byte address 0x4 - core index']
  #allocation1 [shape = 'u32[144,128]{1,0:T(1,128)}', space=vmem, size = 0x12000, scoped, tag = 'internal scratch']
  %s0 = inlined_call_operand.vmem [shape: bf16[2,4,256], index: 0, kind: input, shape index: {}]
  %s1 = inlined_call_operand.vmem [shape: bf16[72,4], index: 1, kind: input, shape index: {}]
  %s2 = inlined_call_operand.vmem [shape: f32[8,1], index: 2, kind: input, shape index: {}]
  %s3 = inlined_call_operand.vmem [shape: bf16[72,8], index: 3, kind: input, shape index: {}]
  %s4 = inlined_call_operand.vmem [shape: f32[8,1], index: 4, kind: input, shape index: {}]
  %s5 = inlined_call_operand.vmem [shape: f32[2,8,12,12], index: 5, kind: output, shape index: {}]
  %s6 = sld [smem:[#allocation0]]
  $region53: #{unet_conv2_forward.1} parent=0
    _
  %s8 = ssub.s32 1, %s6
  %s9 = scalar_select 0, %s8, %s6
  loop: start=0, step=1, limit=4
  $region2: #{unet_conv2_forward.1} parent=0 // loop_pre_header
    _
  $region3: #{unet_conv2_forward.1} parent=0 // loop_header
    %s11 = sphi 0, %s15
    %p12 = scmp.ge.s32.totalorder %s11, 4
    %s21 = sphi 0, %s23
    %s24 = sphi 0, %s21
    %s25 = sphi 0, %s24
    %s41 = sphi 0, %s25
    %s45 = sphi 0, %s45
    %s47 = sphi 0, %s45
    %s48 = sphi 0, %s47
    %s62 = sphi 0, %s48
    %s66 = sphi 0, %s66
    %s68 = sphi 0, %s66
    %s69 = sphi 0, %s68
    %s83 = sphi 0, %s69
    %s87 = sphi 0, %s87
    %s89 = sphi 0, %s87
    %s90 = sphi 0, %s89
    %s104 = sphi 0, %s90
    %s108 = sphi 0, %s108
    %s110 = sphi 0, %s108
    %s111 = sphi 0, %s110
    %s125 = sphi 0, %s111
    %s131 = sphi 0, %s133
    %s134 = sphi 0, %s131
    %s135 = sphi 0, %s134
    %s151 = sphi 0, %s135
  $region4: #{unet_conv2_forward.1} parent=0 // loop_header_branch
    %14 = sbr.rel (%p12) target = $region8
  $region5: #{unet_conv2_forward.1} parent=0 // loop_body
    %s16 = ssub.s32 %s11, 1
    %s17 = ssub.s32 %s11, 2
    %s18 = sadd.s32 %s11, 1
    %s19 = ssub.s32 %s11, %s18
    %p20 = scmp.eq.s32.totalorder %s19, 0
    %s22 = sadd.s32 %s21, 1
    %s23 = scalar_select %p20, %s21, %s22
    %p26 = pneg %p20
    %p27 = scmp.eq.s32.totalorder %s11, 1
    %p28 = por %p26, %p27
    %p29 = scmp.ne.s32.totalorder %s21, %s24
    %p30 = scmp.eq.s32.totalorder %s11, 0
    %p31 = por %p29, %p30
    %p32 = scmp.ne.s32.totalorder %s21, %s24
    %p33 = scmp.eq.s32.totalorder %s16, 1
    %p34 = por %p32, %p33
    %p35 = scmp.ne.s32.totalorder %s24, %s25
    %p36 = scmp.eq.s32.totalorder %s16, 0
    %p37 = por %p35, %p36
    %p38 = scmp.ne.s32.totalorder %s24, %s25
    %p39 = scmp.eq.s32.totalorder %s17, 1
    %p40 = por %p38, %p39
    %p42 = scmp.ne.s32.totalorder %s25, %s41
    %p43 = scmp.eq.s32.totalorder %s17, 0
    %p44 = por %p42, %p43
    %s46 = sadd.s32 %s45, 1
    %p49 = scmp.eq.s32.totalorder %s11, 1
    %p50 = scmp.ne.s32.totalorder %s45, %s47
    %p51 = scmp.eq.s32.totalorder %s11, 0
    %p52 = por %p50, %p51
    %p53 = scmp.ne.s32.totalorder %s45, %s47
    %p54 = scmp.eq.s32.totalorder %s16, 1
    %p55 = por %p53, %p54
    %p56 = scmp.ne.s32.totalorder %s47, %s48
    %p57 = scmp.eq.s32.totalorder %s16, 0
    %p58 = por %p56, %p57
    %p59 = scmp.ne.s32.totalorder %s47, %s48
    %p60 = scmp.eq.s32.totalorder %s17, 1
    %p61 = por %p59, %p60
    %p63 = scmp.ne.s32.totalorder %s48, %s62
    %p64 = scmp.eq.s32.totalorder %s17, 0
    %p65 = por %p63, %p64
    %s67 = sadd.s32 %s66, 1
    %p70 = scmp.eq.s32.totalorder %s11, 1
    %p71 = scmp.ne.s32.totalorder %s66, %s68
    %p72 = scmp.eq.s32.totalorder %s11, 0
    %p73 = por %p71, %p72
    %p74 = scmp.ne.s32.totalorder %s66, %s68
    %p75 = scmp.eq.s32.totalorder %s16, 1
    %p76 = por %p74, %p75
    %p77 = scmp.ne.s32.totalorder %s68, %s69
    %p78 = scmp.eq.s32.totalorder %s16, 0
    %p79 = por %p77, %p78
    %p80 = scmp.ne.s32.totalorder %s68, %s69
    %p81 = scmp.eq.s32.totalorder %s17, 1
    %p82 = por %p80, %p81
    %p84 = scmp.ne.s32.totalorder %s69, %s83
    %p85 = scmp.eq.s32.totalorder %s17, 0
    %p86 = por %p84, %p85
    %s88 = sadd.s32 %s87, 1
    %p91 = scmp.eq.s32.totalorder %s11, 1
    %p92 = scmp.ne.s32.totalorder %s87, %s89
    %p93 = scmp.eq.s32.totalorder %s11, 0
    %p94 = por %p92, %p93
    %p95 = scmp.ne.s32.totalorder %s87, %s89
    %p96 = scmp.eq.s32.totalorder %s16, 1
    %p97 = por %p95, %p96
    %p98 = scmp.ne.s32.totalorder %s89, %s90
    %p99 = scmp.eq.s32.totalorder %s16, 0
    %p100 = por %p98, %p99
    %p101 = scmp.ne.s32.totalorder %s89, %s90
    %p102 = scmp.eq.s32.totalorder %s17, 1
    %p103 = por %p101, %p102
    %p105 = scmp.ne.s32.totalorder %s90, %s104
    %p106 = scmp.eq.s32.totalorder %s17, 0
    %p107 = por %p105, %p106
    %s109 = sadd.s32 %s108, 1
    %p112 = scmp.eq.s32.totalorder %s11, 1
    %p113 = scmp.ne.s32.totalorder %s108, %s110
    %p114 = scmp.eq.s32.totalorder %s11, 0
    %p115 = por %p113, %p114
    %p116 = scmp.ne.s32.totalorder %s108, %s110
    %p117 = scmp.eq.s32.totalorder %s16, 1
    %p118 = por %p116, %p117
    %p119 = scmp.ne.s32.totalorder %s110, %s111
    %p120 = scmp.eq.s32.totalorder %s16, 0
    %p121 = por %p119, %p120
    %p122 = scmp.ne.s32.totalorder %s110, %s111
    %p123 = scmp.eq.s32.totalorder %s17, 1
    %p124 = por %p122, %p123
    %p126 = scmp.ne.s32.totalorder %s111, %s125
    %p127 = scmp.eq.s32.totalorder %s17, 0
    %p128 = por %p126, %p127
    %s129 = ssub.s32 %s11, %s18
    %p130 = scmp.eq.s32.totalorder %s129, 0
    %s132 = sadd.s32 %s131, 1
    %s133 = scalar_select %p130, %s131, %s132
    %p136 = pneg %p130
    %p137 = scmp.eq.s32.totalorder %s11, 1
    %p138 = por %p136, %p137
    %p139 = scmp.ne.s32.totalorder %s131, %s134
    %p140 = scmp.eq.s32.totalorder %s11, 0
    %p141 = por %p139, %p140
    %p142 = scmp.ne.s32.totalorder %s131, %s134
    %p143 = scmp.eq.s32.totalorder %s16, 1
    %p144 = por %p142, %p143
    %p145 = scmp.ne.s32.totalorder %s134, %s135
    %p146 = scmp.eq.s32.totalorder %s16, 0
    %p147 = por %p145, %p146
    %p148 = scmp.ne.s32.totalorder %s134, %s135
    %p149 = scmp.eq.s32.totalorder %s17, 1
    %p150 = por %p148, %p149
    %p152 = scmp.ne.s32.totalorder %s135, %s151
    %p153 = scmp.eq.s32.totalorder %s17, 0
    %p154 = por %p152, %p153
    %p155 = scmp.le.s32.totalorder 1, %s11
    %p156 = scmp.lt.s32.totalorder %s11, 3
    %p157 = pnand %p155, %p156
    %p158 = pneg %p157
    // Predicated region
    $region9: #{unet_conv2_forward.1} parent=5 // pred_check
      _
    $region10: #{unet_conv2_forward.1} parent=5 // pred_check_branch
      %160 = sbr.rel (%p157) target = $region12
    $region11: #{unet_conv2_forward.1} parent=5 // pred_region
      %s161 = ssub.s32 %s11, 1
      // Predicated region
      $region13: #{unet_conv2_forward.1} parent=11 // pred_check
        %p162 = pneg %p58
      $region14: #{unet_conv2_forward.1} parent=11 // pred_check_branch
        %164 = sbr.rel (%p162) target = $region16
      $region15: #{unet_conv2_forward.1} parent=11 // pred_region
        _
      $region16: #{unet_conv2_forward.1} parent=11 // pred_fallthru
        _
      // Predicated region
      $region17: #{unet_conv2_forward.1} parent=11 // pred_check
        %p165 = pneg %p79
      $region18: #{unet_conv2_forward.1} parent=11 // pred_check_branch
        %167 = sbr.rel (%p165) target = $region20
      $region19: #{unet_conv2_forward.1} parent=11 // pred_region
        _
      $region20: #{unet_conv2_forward.1} parent=11 // pred_fallthru
        _
      // Predicated region
      $region21: #{unet_conv2_forward.1} parent=11 // pred_check
        %p168 = pneg %p100
      $region22: #{unet_conv2_forward.1} parent=11 // pred_check_branch
        %170 = sbr.rel (%p168) target = $region24
      $region23: #{unet_conv2_forward.1} parent=11 // pred_region
        _
      $region24: #{unet_conv2_forward.1} parent=11 // pred_fallthru
        _
      // Predicated region
      $region25: #{unet_conv2_forward.1} parent=11 // pred_check
        %p171 = pneg %p121
      $region26: #{unet_conv2_forward.1} parent=11 // pred_check_branch
        %173 = sbr.rel (%p171) target = $region28
      $region27: #{unet_conv2_forward.1} parent=11 // pred_region
        _
      $region28: #{unet_conv2_forward.1} parent=11 // pred_fallthru
        _
    $region12: #{unet_conv2_forward.1} parent=5 // pred_fallthru
      _
    %p174 = scmp.lt.s32.totalorder %s11, 2
    // Predicated region
    $region29: #{unet_conv2_forward.1} parent=5 // pred_check
      %p175 = pneg %p174
    $region30: #{unet_conv2_forward.1} parent=5 // pred_check_branch
      %177 = sbr.rel (%p175) target = $region32
    $region31: #{unet_conv2_forward.1} parent=5 // pred_region
      // Predicated region
      $region33: #{unet_conv2_forward.1} parent=31 // pred_check
        %p178 = pneg %p31
      $region34: #{unet_conv2_forward.1} parent=31 // pred_check_branch
        %180 = sbr.rel (%p178) target = $region36
      $region35: #{unet_conv2_forward.1} parent=31 // pred_region
        %p181 = scmp.lt.s32.totalorder %s11, 1
        %s182 = scalar_select %p181, %s11, 1
        %s183 = smul.addr %s182, 2
        %s184 = smul.addr %s183, 2
        %s185 = scalar_lea.vmem %s0, %s184
      $region36: #{unet_conv2_forward.1} parent=31 // pred_fallthru
        _
    $region32: #{unet_conv2_forward.1} parent=5 // pred_fallthru
      _
    %p186 = scmp.le.s32.totalorder 1, %s11
    %p187 = scmp.lt.s32.totalorder %s11, 3
    %p188 = pnand %p186, %p187
    %p189 = pneg %p188
    // Predicated region
    $region37: #{unet_conv2_forward.1} parent=5 // pred_check
      _
    $region38: #{unet_conv2_forward.1} parent=5 // pred_check_branch
      %191 = sbr.rel (%p188) target = $region40
    $region39: #{unet_conv2_forward.1} parent=5 // pred_region
      %s192 = ssub.s32 %s11, 1
      %p193 = scmp.lt.s32.totalorder %s16, 1
      %s194 = scalar_select %p193, %s16, 1
      %s195 = smul.addr %s194, 2
      %s196 = smul.addr %s195, 2
      %s197 = scalar_lea.vmem %s0, %s196
      %p198 = pneg %p37
      %p199 = pneg %p34
      %p200 = pneg %p58
      %p201 = pneg %p55
      %p202 = pneg %p79
      %p203 = pneg %p76
      %p204 = pneg %p100
      %p205 = pneg %p97
      %p206 = pneg %p121
      %p207 = pneg %p118
      %p208 = pneg %p147
      %p209 = pneg %p144
      %p210 = scmp.lt.s32.totalorder %s16, 1
      %s211 = scalar_select %p210, %s16, 1
      %s212 = smul.addr %s211, 16
      %s213 = smul.addr %s212, 8
      %s214 = scalar_lea.vmem %s5, %s213
      %p215 = scmp.lt.s32.totalorder %s16, 1
      %s216 = scalar_select %p215, %s16, 1
      %s217 = smul.addr %s216, 2
      %s218 = smul.addr %s217, 2
      %s219 = scalar_lea.vmem %s0, %s218
      %p220 = scmp.lt.s32.totalorder %s16, 1
      %s221 = scalar_select %p220, %s16, 1
      %s222 = smul.addr %s221, 16
      %s223 = smul.addr %s222, 8
      %s224 = scalar_lea.vmem %s5, %s223
      %v226 = vld [vmem:[%s219] sm:$0xf]
      %v227 = vld [vmem:[%s1] sm:$0xf]
      %v228 = vld [vmem:[%s1 + $0x4] sm:$0xf]
      %v229 = vld [vmem:[%s1 + $0x8] sm:$0xf]
      %v230 = vld [vmem:[%s1 + $0xc] sm:$0xf]
      %v231 = vld [vmem:[%s1 + $0x10] sm:$0xf]
      %v232 = vld [vmem:[%s1 + $0x14] sm:$0xf]
      %v233 = vld [vmem:[%s1 + $0x18] sm:$0xf]
      %v234 = vld [vmem:[%s1 + $0x1c] sm:$0xf]
      %v235 = vld [vmem:[%s1 + $0x20] sm:$0xf]
      %v245 = vunpack.c.l.b16 %v227
      %v246 = vunpack.c.l.b16 %v228
      %v247 = vunpack.c.l.b16 %v229
      %v248 = vunpack.c.l.b16 %v230
      %v249 = vunpack.c.l.b16 %v231
      %v250 = vunpack.c.l.b16 %v232
      %v251 = vunpack.c.l.b16 %v233
      %v252 = vunpack.c.l.b16 %v234
      %v253 = vunpack.c.l.b16 %v235
      %v254 = vpack.c.b16 %v246, %v245
      %v255 = vpack.c.b16 %v248, %v247
      %v256 = vpack.c.b16 %v250, %v249
      %v257 = vpack.c.b16 %v252, %v251
      %v258 = vpack.c.b16 %v253, %v253
      %v261 = vunpack.c.l.s4 1983009808
      %v262 = vunpack.c.0.s8 %v261
      %v263 = vlaneseq
      %v264 = vshrl.u32 %v263, 7
      %v265 = vsub.s32 %v262, %v264
      %v266 = vrot.slane %v226, %v265
      %v267 = vcombine.high %v266, %v266
      %vm268 = vcmask 31744
      %v270 = vsel %vm268, %v254, 0
      %v273 = vsel %vm268, %v255, 0
      %v276 = vsel %vm268, %v256, 0
      %v279 = vsel %vm268, %v257, 0
      %v282 = vsel %vm268, %v258, 0
      %vm284 = vcmask 1041408
      %v286 = vsel %vm284, %v266, 0
      %v289 = vsel %vm284, %v267, 0
      %291 = vmatprep.subr.bf16.mxu0 %v289
      %292 = vmatpush1.bf16.msra.mxu0 %v286
      %293 = vmatprep.subr.bf16.mxu0 0
      %294 = vmatpush1.bf16.msra.mxu0 0
      %295 = vmatprep.subr.bf16.mxu0 0
      %296 = vmatpush1.bf16.msra.mxu0 0
      %297 = vmatprep.subr.bf16.mxu0 0
      %298 = vmatpush1.bf16.msra.mxu0 0
      %299 = vmatprep.subr.bf16.mxu0 0
      %300 = vmatpush1.bf16.msra.mxu0 0
      %301 = vmatprep.subr.bf16.mxu0 0
      %302 = vmatpush1.bf16.msra.mxu0 0
      %303 = vmatprep.subr.bf16.mxu0 0
      %304 = vmatpush1.bf16.msra.mxu0 0
      %305 = vmatprep.subr.bf16.mxu0 0
      %306 = vmatpush1.bf16.msra.mxu0 0
      %307 = vmatprep.subr.bf16.mxu0 0
      %308 = vmatpush1.bf16.msra.mxu0 0
      %309 = vmatprep.subr.bf16.mxu0 0
      %310 = vmatpush1.bf16.msra.mxu0 0
      %311 = vmatprep.subr.bf16.mxu0 0
      %312 = vmatpush1.bf16.msra.mxu0 0
      %313 = vmatprep.subr.bf16.mxu0 0
      %314 = vmatpush1.bf16.msra.mxu0 0
      %315 = vmatprep.subr.bf16.mxu0 0
      %316 = vmatpush1.bf16.msra.mxu0 0
      %317 = vmatprep.subr.bf16.mxu0 0
      %318 = vmatpush1.bf16.msra.mxu0 0
      %319 = vmatprep.subr.bf16.mxu0 0
      %320 = vmatpush1.bf16.msra.mxu0 0
      %321 = vmatprep.subr.bf16.mxu0 0
      %322 = vmatpush1.bf16.msra.mxu0 0
      %323 = vmatprep.mubr.bf16.mxu0 0
      %324 = vmatmul.mubr.bf16.gmra.mrb[0].mxu0 %v270
      %v325 = vpop.f32.mrb[0].mxu0
      %v326 = vadd.f32 0.0, %v325
      %v327 = vpop.f32.mrb[0].mxu0
      %v328 = vadd.f32 0.0, %v327
      %v329 = vpop.f32.mrb[0].mxu0
      %v330 = vadd.f32 0.0, %v329
      %v331 = vpop.f32.mrb[0].mxu0
      %v332 = vadd.f32 0.0, %v331
      %333 = vmatprep.mubr.bf16.mxu0 0
      %334 = vmatmul.mubr.bf16.gmra.mrb[0].mxu0 %v273
      %v335 = vpop.f32.mrb[0].mxu0
      %v336 = vadd.f32 0.0, %v335
      %v337 = vpop.f32.mrb[0].mxu0
      %v338 = vadd.f32 0.0, %v337
      %v339 = vpop.f32.mrb[0].mxu0
      %v340 = vadd.f32 0.0, %v339
      %v341 = vpop.f32.mrb[0].mxu0
      %v342 = vadd.f32 0.0, %v341
      %343 = vmatprep.mubr.bf16.mxu0 0
      %344 = vmatmul.mubr.bf16.gmra.mrb[0].mxu0 %v276
      %v345 = vpop.f32.mrb[0].mxu0
      %v346 = vadd.f32 0.0, %v345
      %v347 = vpop.f32.mrb[0].mxu0
      %v348 = vadd.f32 0.0, %v347
      %v349 = vpop.f32.mrb[0].mxu0
      %v350 = vadd.f32 0.0, %v349
      %v351 = vpop.f32.mrb[0].mxu0
      %v352 = vadd.f32 0.0, %v351
      %353 = vmatprep.mubr.bf16.mxu0 0
      %354 = vmatmul.mubr.bf16.gmra.mrb[0].mxu0 %v279
      %v355 = vpop.f32.mrb[0].mxu0
      %v356 = vadd.f32 0.0, %v355
      %v357 = vpop.f32.mrb[0].mxu0
      %v358 = vadd.f32 0.0, %v357
      %v359 = vpop.f32.mrb[0].mxu0
      %v360 = vadd.f32 0.0, %v359
      %v361 = vpop.f32.mrb[0].mxu0
      %v362 = vadd.f32 0.0, %v361
      %363 = vmatprep.mubr.bf16.mxu0 0
      %364 = vmatmul.mubr.bf16.gmra.mrb[0].mxu0 %v282
      %v365 = vpop.f32.mrb[0].mxu0
      %v366 = vadd.f32 0.0, %v365
      %v367 = vpop.f32.mrb[0].mxu0
      %v368 = vadd.f32 0.0, %v367
      %v369 = vpop.f32.mrb[0].mxu0
      %v370 = vpop.f32.mrb[0].mxu0
      %371 = vdwg.mxu0
      %372 = vrot.lane.b32.xlu0 %v330, 127
      %v373 = vpop.permute.xlu0 %372
      %374 = vrot.lane.b32.xlu0 %v332, 127
      %v375 = vpop.permute.xlu0 %374
      %v376 = vlaneseq
      %v377 = vand.u32 %v376, 127
      %vm378 = vcmp.lt.s32.totalorder %v377, 127
      %v379 = vsel %vm378, %v373, %v375
      %v380 = vsel %vm378, %v375, %v373
      %v381 = vadd.f32 %v326, %v379
      %v382 = vadd.f32 %v328, %v380
      %383 = vrot.lane.b32.xlu0 %v336, 126
      %v384 = vpop.permute.xlu0 %383
      %385 = vrot.lane.b32.xlu0 %v338, 126
      %v386 = vpop.permute.xlu0 %385
      %vm387 = vcmp.lt.s32.totalorder %v377, 126
      %v388 = vsel %vm387, %v384, %v386
      %v389 = vsel %vm387, %v386, %v384
      %v390 = vadd.f32 %v381, %v388
      %v391 = vadd.f32 %v382, %v389
      %392 = vrot.lane.b32.xlu0 %v340, 112
      %v393 = vpop.permute.xlu0 %392
      %394 = vrot.lane.b32.xlu0 %v342, 112
      %v395 = vpop.permute.xlu0 %394
      %vm396 = vcmp.lt.s32.totalorder %v377, 112
      %v397 = vsel %vm396, %v393, %v395
      %v398 = vsel %vm396, %v395, %v393
      %v399 = vadd.f32 %v390, %v397
      %v400 = vadd.f32 %v391, %v398
      %401 = vrot.lane.b32.xlu0 %v346, 111
      %v402 = vpop.permute.xlu0 %401
      %403 = vrot.lane.b32.xlu0 %v348, 111
      %v404 = vpop.permute.xlu0 %403
      %vm405 = vcmp.lt.s32.totalorder %v377, 111
      %v406 = vsel %vm405, %v402, %v404
      %v407 = vsel %vm405, %v404, %v402
      %v408 = vadd.f32 %v399, %v406
      %v409 = vadd.f32 %v400, %v407
      %410 = vrot.lane.b32.xlu0 %v350, 110
      %v411 = vpop.permute.xlu0 %410
      %412 = vrot.lane.b32.xlu0 %v352, 110
      %v413 = vpop.permute.xlu0 %412
      %vm414 = vcmp.lt.s32.totalorder %v377, 110
      %v415 = vsel %vm414, %v411, %v413
      %v416 = vsel %vm414, %v413, %v411
      %v417 = vadd.f32 %v408, %v415
      %v418 = vadd.f32 %v409, %v416
      %419 = vrot.lane.b32.xlu0 %v356, 96
      %v420 = vpop.permute.xlu0 %419
      %421 = vrot.lane.b32.xlu0 %v358, 96
      %v422 = vpop.permute.xlu0 %421
      %vm423 = vcmp.lt.s32.totalorder %v377, 96
      %v424 = vsel %vm423, %v420, %v422
      %v425 = vsel %vm423, %v422, %v420
      %v426 = vadd.f32 %v417, %v424
      %v427 = vadd.f32 %v418, %v425
      %428 = vrot.lane.b32.xlu0 %v360, 95
      %v429 = vpop.permute.xlu0 %428
      %430 = vrot.lane.b32.xlu0 %v362, 95
      %v431 = vpop.permute.xlu0 %430
      %vm432 = vcmp.lt.s32.totalorder %v377, 95
      %v433 = vsel %vm432, %v429, %v431
      %v434 = vsel %vm432, %v431, %v429
      %v435 = vadd.f32 %v426, %v433
      %v436 = vadd.f32 %v427, %v434
      %437 = vrot.lane.b32.xlu0 %v366, 94
      %v438 = vpop.permute.xlu0 %437
      %439 = vrot.lane.b32.xlu0 %v368, 94
      %v440 = vpop.permute.xlu0 %439
      %vm441 = vcmp.lt.s32.totalorder %v377, 94
      %v442 = vsel %vm441, %v438, %v440
      %v443 = vsel %vm441, %v440, %v438
      %v444 = vadd.f32 %v435, %v442
      %v445 = vadd.f32 %v436, %v443
      %v446 = vld [vmem:[%s2] sm:$0xff]
      %448 = vset.pattern.permute.xlu0 0
      %449 = vperm.xlu0 %448, %v446
      %v450 = vpop.permute.xlu0 %449
      %v452 = vadd.f32 %v444, %v450
      %v453 = vadd.f32 %v445, %v450
      %v454 = vmax.f32 %v452, 0.0
      %v455 = vmax.f32 %v453, 0.0
      %v456 = vpack.c.bf16 %v454, %v454
      %v457 = vpack.c.bf16 %v455, %v455
      %v458 = vld [vmem:[%s3] sm:$0xf]
      %v459 = vld [vmem:[%s3 + $0x4] sm:$0xf]
      %v460 = vld [vmem:[%s3 + $0x8] sm:$0xf]
      %v461 = vld [vmem:[%s3 + $0xc] sm:$0xf]
      %v462 = vld [vmem:[%s3 + $0x10] sm:$0xf]
      %v463 = vld [vmem:[%s3 + $0x14] sm:$0xf]
      %v464 = vld [vmem:[%s3 + $0x18] sm:$0xf]
      %v465 = vld [vmem:[%s3 + $0x1c] sm:$0xf]
      %v466 = vld [vmem:[%s3 + $0x20] sm:$0xf]
      %v476 = vunpack.c.l.b16 %v458
      %v477 = vunpack.c.l.b16 %v459
      %v478 = vunpack.c.l.b16 %v460
      %v479 = vunpack.c.l.b16 %v461
      %v480 = vunpack.c.l.b16 %v462
      %v481 = vunpack.c.l.b16 %v463
      %v482 = vunpack.c.l.b16 %v464
      %v483 = vunpack.c.l.b16 %v465
      %v484 = vunpack.c.l.b16 %v466
      %v485 = vpack.c.b16 %v477, %v476
      %v486 = vpack.c.b16 %v479, %v478
      %v487 = vpack.c.b16 %v481, %v480
      %v488 = vpack.c.b16 %v483, %v482
      %v489 = vpack.c.b16 %v484, %v484
      %vm490 = vcmask 64512
      %v492 = vsel %vm490, %v485, 0
      %v495 = vsel %vm490, %v486, 0
      %v498 = vsel %vm490, %v487, 0
      %v501 = vsel %vm490, %v488, 0
      %v504 = vsel %vm490, %v489, 0
      %vm506 = vcmask 1043456
      %v508 = vsel %vm506, %v456, 0
      %v511 = vsel %vm506, %v457, 0
      %513 = vmatprep.subr.bf16.mxu0 %v511
      %514 = vmatpush1.bf16.msra.mxu0 %v508
      %515 = vmatprep.subr.bf16.mxu0 0
      %516 = vmatpush1.bf16.msra.mxu0 0
      %517 = vmatprep.subr.bf16.mxu0 0
      %518 = vmatpush1.bf16.msra.mxu0 0
      %519 = vmatprep.subr.bf16.mxu0 0
      %520 = vmatpush1.bf16.msra.mxu0 0
      %521 = vmatprep.subr.bf16.mxu0 0
      %522 = vmatpush1.bf16.msra.mxu0 0
      %523 = vmatprep.subr.bf16.mxu0 0
      %524 = vmatpush1.bf16.msra.mxu0 0
      %525 = vmatprep.subr.bf16.mxu0 0
      %526 = vmatpush1.bf16.msra.mxu0 0
      %527 = vmatprep.subr.bf16.mxu0 0
      %528 = vmatpush1.bf16.msra.mxu0 0
      %529 = vmatprep.subr.bf16.mxu0 0
      %530 = vmatpush1.bf16.msra.mxu0 0
      %531 = vmatprep.subr.bf16.mxu0 0
      %532 = vmatpush1.bf16.msra.mxu0 0
      %533 = vmatprep.subr.bf16.mxu0 0
      %534 = vmatpush1.bf16.msra.mxu0 0
      %535 = vmatprep.subr.bf16.mxu0 0
      %536 = vmatpush1.bf16.msra.mxu0 0
      %537 = vmatprep.subr.bf16.mxu0 0
      %538 = vmatpush1.bf16.msra.mxu0 0
      %539 = vmatprep.subr.bf16.mxu0 0
      %540 = vmatpush1.bf16.msra.mxu0 0
      %541 = vmatprep.subr.bf16.mxu0 0
      %542 = vmatpush1.bf16.msra.mxu0 0
      %543 = vmatprep.subr.bf16.mxu0 0
      %544 = vmatpush1.bf16.msra.mxu0 0
      %545 = vmatprep.mubr.bf16.mxu0 0
      %546 = vmatmul.mubr.bf16.gmra.mrb[0].mxu0 %v492
      %v547 = vpop.f32.mrb[0].mxu0
      %v548 = vadd.f32 0.0, %v547
      %v549 = vpop.f32.mrb[0].mxu0
      %v550 = vadd.f32 0.0, %v549
      %v551 = vpop.f32.mrb[0].mxu0
      %v552 = vadd.f32 0.0, %v551
      %v553 = vpop.f32.mrb[0].mxu0
      %v554 = vadd.f32 0.0, %v553
      %555 = vmatprep.mubr.bf16.mxu0 0
      %556 = vmatmul.mubr.bf16.gmra.mrb[0].mxu0 %v495
      %v557 = vpop.f32.mrb[0].mxu0
      %v558 = vadd.f32 0.0, %v557
      %v559 = vpop.f32.mrb[0].mxu0
      %v560 = vadd.f32 0.0, %v559
      %v561 = vpop.f32.mrb[0].mxu0
      %v562 = vadd.f32 0.0, %v561
      %v563 = vpop.f32.mrb[0].mxu0
      %v564 = vadd.f32 0.0, %v563
      %565 = vmatprep.mubr.bf16.mxu0 0
      %566 = vmatmul.mubr.bf16.gmra.mrb[0].mxu0 %v498
      %v567 = vpop.f32.mrb[0].mxu0
      %v568 = vadd.f32 0.0, %v567
      %v569 = vpop.f32.mrb[0].mxu0
      %v570 = vadd.f32 0.0, %v569
      %v571 = vpop.f32.mrb[0].mxu0
      %v572 = vadd.f32 0.0, %v571
      %v573 = vpop.f32.mrb[0].mxu0
      %v574 = vadd.f32 0.0, %v573
      %575 = vmatprep.mubr.bf16.mxu0 0
      %576 = vmatmul.mubr.bf16.gmra.mrb[0].mxu0 %v501
      %v577 = vpop.f32.mrb[0].mxu0
      %v578 = vadd.f32 0.0, %v577
      %v579 = vpop.f32.mrb[0].mxu0
      %v580 = vadd.f32 0.0, %v579
      %v581 = vpop.f32.mrb[0].mxu0
      %v582 = vadd.f32 0.0, %v581
      %v583 = vpop.f32.mrb[0].mxu0
      %v584 = vadd.f32 0.0, %v583
      %585 = vmatprep.mubr.bf16.mxu0 0
      %586 = vmatmul.mubr.bf16.gmra.mrb[0].mxu0 %v504
      %v587 = vpop.f32.mrb[0].mxu0
      %v588 = vadd.f32 0.0, %v587
      %v589 = vpop.f32.mrb[0].mxu0
      %v590 = vadd.f32 0.0, %v589
      %v591 = vpop.f32.mrb[0].mxu0
      %v592 = vpop.f32.mrb[0].mxu0
      %593 = vdwg.mxu0
      %594 = vrot.lane.b32.xlu0 %v552, 127
      %v595 = vpop.permute.xlu0 %594
      %596 = vrot.lane.b32.xlu0 %v554, 127
      %v597 = vpop.permute.xlu0 %596
      %v598 = vsel %vm378, %v595, %v597
      %v599 = vsel %vm378, %v597, %v595
      %v600 = vadd.f32 %v548, %v598
      %v601 = vadd.f32 %v550, %v599
      %602 = vrot.lane.b32.xlu0 %v558, 126
      %v603 = vpop.permute.xlu0 %602
      %604 = vrot.lane.b32.xlu0 %v560, 126
      %v605 = vpop.permute.xlu0 %604
      %v606 = vsel %vm387, %v603, %v605
      %v607 = vsel %vm387, %v605, %v603
      %v608 = vadd.f32 %v600, %v606
      %v609 = vadd.f32 %v601, %v607
      %610 = vrot.lane.b32.xlu0 %v562, 112
      %v611 = vpop.permute.xlu0 %610
      %612 = vrot.lane.b32.xlu0 %v564, 112
      %v613 = vpop.permute.xlu0 %612
      %v614 = vsel %vm396, %v611, %v613
      %v615 = vsel %vm396, %v613, %v611
      %v616 = vadd.f32 %v608, %v614
      %v617 = vadd.f32 %v609, %v615
      %618 = vrot.lane.b32.xlu0 %v568, 111
      %v619 = vpop.permute.xlu0 %618
      %620 = vrot.lane.b32.xlu0 %v570, 111
      %v621 = vpop.permute.xlu0 %620
      %v622 = vsel %vm405, %v619, %v621
      %v623 = vsel %vm405, %v621, %v619
      %v624 = vadd.f32 %v616, %v622
      %v625 = vadd.f32 %v617, %v623
      %626 = vrot.lane.b32.xlu0 %v572, 110
      %v627 = vpop.permute.xlu0 %626
      %628 = vrot.lane.b32.xlu0 %v574, 110
      %v629 = vpop.permute.xlu0 %628
      %v630 = vsel %vm414, %v627, %v629
      %v631 = vsel %vm414, %v629, %v627
      %v632 = vadd.f32 %v624, %v630
      %v633 = vadd.f32 %v625, %v631
      %634 = vrot.lane.b32.xlu0 %v578, 96
      %v635 = vpop.permute.xlu0 %634
      %636 = vrot.lane.b32.xlu0 %v580, 96
      %v637 = vpop.permute.xlu0 %636
      %v638 = vsel %vm423, %v635, %v637
      %v639 = vsel %vm423, %v637, %v635
      %v640 = vadd.f32 %v632, %v638
      %v641 = vadd.f32 %v633, %v639
      %642 = vrot.lane.b32.xlu0 %v582, 95
      %v643 = vpop.permute.xlu0 %642
      %644 = vrot.lane.b32.xlu0 %v584, 95
      %v645 = vpop.permute.xlu0 %644
      %v646 = vsel %vm432, %v643, %v645
      %v647 = vsel %vm432, %v645, %v643
      %v648 = vadd.f32 %v640, %v646
      %v649 = vadd.f32 %v641, %v647
      %650 = vrot.lane.b32.xlu0 %v588, 94
      %v651 = vpop.permute.xlu0 %650
      %652 = vrot.lane.b32.xlu0 %v590, 94
      %v653 = vpop.permute.xlu0 %652
      %v654 = vsel %vm441, %v651, %v653
      %v655 = vsel %vm441, %v653, %v651
      %v656 = vadd.f32 %v648, %v654
      %v657 = vadd.f32 %v649, %v655
      %v658 = vld [vmem:[%s4] sm:$0xff]
      %660 = vset.pattern.permute.xlu0 0
      %661 = vperm.xlu0 %660, %v658
      %v662 = vpop.permute.xlu0 %661
      %v664 = vadd.f32 %v656, %v662
      %v665 = vadd.f32 %v657, %v662
      %v666 = vmax.f32 %v664, 0.0
      %v667 = vmax.f32 %v665, 0.0
      %v669 = vcombine.high %v666, %v666
      %v671 = vunpack.c.l.s4 1966171168
      %v672 = vunpack.c.0.s8 %v671
      %v673 = vlaneseq
      %v674 = vshrl.u32 %v673, 7
      %v675 = vsub.s32 %v672, %v674
      %v676 = vrot.slane %v666, %v675
      %v678 = vunpack.c.l.s4 1966171168
      %v679 = vunpack.c.0.s8 %v678
      %v680 = vlaneseq
      %v681 = vshrl.u32 %v680, 7
      %v682 = vsub.s32 %v679, %v681
      %v683 = vrot.slane %v669, %v682
      %v684 = vcombine.high %v676, %v676
      %v685 = vcombine.high %v683, %v683
      %v687 = vunpack.c.l.s4 1966171168
      %v688 = vunpack.c.0.s8 %v687
      %v689 = vlaneseq
      %v690 = vshrl.u32 %v689, 7
      %v691 = vsub.s32 %v688, %v690
      %v692 = vrot.slane %v676, %v691
      %v694 = vunpack.c.l.s4 1966171168
      %v695 = vunpack.c.0.s8 %v694
      %v696 = vlaneseq
      %v697 = vshrl.u32 %v696, 7
      %v698 = vsub.s32 %v695, %v697
      %v699 = vrot.slane %v683, %v698
      %v701 = vunpack.c.l.s4 1966171168
      %v702 = vunpack.c.0.s8 %v701
      %v703 = vlaneseq
      %v704 = vshrl.u32 %v703, 7
      %v705 = vsub.s32 %v702, %v704
      %v706 = vrot.slane %v684, %v705
      %v708 = vunpack.c.l.s4 1966171168
      %v709 = vunpack.c.0.s8 %v708
      %v710 = vlaneseq
      %v711 = vshrl.u32 %v710, 7
      %v712 = vsub.s32 %v709, %v711
      %v713 = vrot.slane %v685, %v712
      %v714 = vcombine.high %v692, %v692
      %v715 = vcombine.high %v699, %v699
      %v716 = vcombine.high %v706, %v706
      %v717 = vcombine.high %v713, %v713
      %vm726 = vcmask 90112
      %727 = vst.msk [vmem:[%s224] sm:$0x1] %vm726, %v692
      %728 = vst.msk [vmem:[%s224 + $0x10] sm:$0x1] %vm726, %v706
      %729 = vst.msk [vmem:[%s224 + $0x20] sm:$0x1] %vm726, %v714
      %730 = vst.msk [vmem:[%s224 + $0x30] sm:$0x1] %vm726, %v716
      %731 = vst.msk [vmem:[%s224 + $0x40] sm:$0x1] %vm726, %v699
      %732 = vst.msk [vmem:[%s224 + $0x50] sm:$0x1] %vm726, %v713
      %733 = vst.msk [vmem:[%s224 + $0x60] sm:$0x1] %vm726, %v715
      %734 = vst.msk [vmem:[%s224 + $0x70] sm:$0x1] %vm726, %v717
      %v735 = vlaneseq
      %v736 = vshrl.u32 %v735, 7
      %v737 = vsub.s32 0, %v736
      %v738 = vrot.slane %v692, %v737
      %v739 = vlaneseq
      %v740 = vshrl.u32 %v739, 7
      %v741 = vsub.s32 0, %v740
      %v742 = vrot.slane %v706, %v741
      %v743 = vlaneseq
      %v744 = vshrl.u32 %v743, 7
      %v745 = vsub.s32 0, %v744
      %v746 = vrot.slane %v714, %v745
      %v747 = vlaneseq
      %v748 = vshrl.u32 %v747, 7
      %v749 = vsub.s32 0, %v748
      %v750 = vrot.slane %v716, %v749
      %v751 = vlaneseq
      %v752 = vshrl.u32 %v751, 7
      %v753 = vsub.s32 0, %v752
      %v754 = vrot.slane %v699, %v753
      %v755 = vlaneseq
      %v756 = vshrl.u32 %v755, 7
      %v757 = vsub.s32 0, %v756
      %v758 = vrot.slane %v713, %v757
      %v759 = vlaneseq
      %v760 = vshrl.u32 %v759, 7
      %v761 = vsub.s32 0, %v760
      %v762 = vrot.slane %v715, %v761
      %v763 = vlaneseq
      %v764 = vshrl.u32 %v763, 7
      %v765 = vsub.s32 0, %v764
      %v766 = vrot.slane %v717, %v765
      %767 = vrot.lane.b32.xlu0 %v738, 112
      %v768 = vpop.permute.xlu0 %767
      %769 = vrot.lane.b32.xlu0 %v742, 112
      %v770 = vpop.permute.xlu0 %769
      %771 = vrot.lane.b32.xlu0 %v746, 112
      %v772 = vpop.permute.xlu0 %771
      %773 = vrot.lane.b32.xlu0 %v750, 112
      %v774 = vpop.permute.xlu0 %773
      %775 = vrot.lane.b32.xlu0 %v754, 112
      %v776 = vpop.permute.xlu0 %775
      %777 = vrot.lane.b32.xlu0 %v758, 112
      %v778 = vpop.permute.xlu0 %777
      %779 = vrot.lane.b32.xlu0 %v762, 112
      %v780 = vpop.permute.xlu0 %779
      %781 = vrot.lane.b32.xlu0 %v766, 112
      %v782 = vpop.permute.xlu0 %781
      %791 = vst.msk [vmem:[%s224 + $0x1] sm:$0x1] %vm726, %v768
      %792 = vst.msk [vmem:[%s224 + $0x11] sm:$0x1] %vm726, %v770
      %793 = vst.msk [vmem:[%s224 + $0x21] sm:$0x1] %vm726, %v772
      %794 = vst.msk [vmem:[%s224 + $0x31] sm:$0x1] %vm726, %v774
      %795 = vst.msk [vmem:[%s224 + $0x41] sm:$0x1] %vm726, %v776
      %796 = vst.msk [vmem:[%s224 + $0x51] sm:$0x1] %vm726, %v778
      %797 = vst.msk [vmem:[%s224 + $0x61] sm:$0x1] %vm726, %v780
      %798 = vst.msk [vmem:[%s224 + $0x71] sm:$0x1] %vm726, %v782
      %799 = vrot.lane.b32.xlu0 %v738, 96
      %v800 = vpop.permute.xlu0 %799
      %801 = vrot.lane.b32.xlu0 %v742, 96
      %v802 = vpop.permute.xlu0 %801
      %803 = vrot.lane.b32.xlu0 %v746, 96
      %v804 = vpop.permute.xlu0 %803
      %805 = vrot.lane.b32.xlu0 %v750, 96
      %v806 = vpop.permute.xlu0 %805
      %807 = vrot.lane.b32.xlu0 %v754, 96
      %v808 = vpop.permute.xlu0 %807
      %809 = vrot.lane.b32.xlu0 %v758, 96
      %v810 = vpop.permute.xlu0 %809
      %811 = vrot.lane.b32.xlu0 %v762, 96
      %v812 = vpop.permute.xlu0 %811
      %813 = vrot.lane.b32.xlu0 %v766, 96
      %v814 = vpop.permute.xlu0 %813
      %823 = vst.msk [vmem:[%s224 + $0x2] sm:$0x1] %vm726, %v800
      %824 = vst.msk [vmem:[%s224 + $0x12] sm:$0x1] %vm726, %v802
      %825 = vst.msk [vmem:[%s224 + $0x22] sm:$0x1] %vm726, %v804
      %826 = vst.msk [vmem:[%s224 + $0x32] sm:$0x1] %vm726, %v806
      %827 = vst.msk [vmem:[%s224 + $0x42] sm:$0x1] %vm726, %v808
      %828 = vst.msk [vmem:[%s224 + $0x52] sm:$0x1] %vm726, %v810
      %829 = vst.msk [vmem:[%s224 + $0x62] sm:$0x1] %vm726, %v812
      %830 = vst.msk [vmem:[%s224 + $0x72] sm:$0x1] %vm726, %v814
      %831 = vrot.lane.b32.xlu0 %v738, 80
      %v832 = vpop.permute.xlu0 %831
      %833 = vrot.lane.b32.xlu0 %v742, 80
      %v834 = vpop.permute.xlu0 %833
      %835 = vrot.lane.b32.xlu0 %v746, 80
      %v836 = vpop.permute.xlu0 %835
      %837 = vrot.lane.b32.xlu0 %v750, 80
      %v838 = vpop.permute.xlu0 %837
      %839 = vrot.lane.b32.xlu0 %v754, 80
      %v840 = vpop.permute.xlu0 %839
      %841 = vrot.lane.b32.xlu0 %v758, 80
      %v842 = vpop.permute.xlu0 %841
      %843 = vrot.lane.b32.xlu0 %v762, 80
      %v844 = vpop.permute.xlu0 %843
      %845 = vrot.lane.b32.xlu0 %v766, 80
      %v846 = vpop.permute.xlu0 %845
      %855 = vst.msk [vmem:[%s224 + $0x3] sm:$0x1] %vm726, %v832
      %856 = vst.msk [vmem:[%s224 + $0x13] sm:$0x1] %vm726, %v834
      %857 = vst.msk [vmem:[%s224 + $0x23] sm:$0x1] %vm726, %v836
      %858 = vst.msk [vmem:[%s224 + $0x33] sm:$0x1] %vm726, %v838
      %859 = vst.msk [vmem:[%s224 + $0x43] sm:$0x1] %vm726, %v840
      %860 = vst.msk [vmem:[%s224 + $0x53] sm:$0x1] %vm726, %v842
      %861 = vst.msk [vmem:[%s224 + $0x63] sm:$0x1] %vm726, %v844
      %862 = vst.msk [vmem:[%s224 + $0x73] sm:$0x1] %vm726, %v846
      %863 = vrot.lane.b32.xlu0 %v738, 64
      %v864 = vpop.permute.xlu0 %863
      %865 = vrot.lane.b32.xlu0 %v742, 64
      %v866 = vpop.permute.xlu0 %865
      %867 = vrot.lane.b32.xlu0 %v746, 64
      %v868 = vpop.permute.xlu0 %867
      %869 = vrot.lane.b32.xlu0 %v750, 64
      %v870 = vpop.permute.xlu0 %869
      %871 = vrot.lane.b32.xlu0 %v754, 64
      %v872 = vpop.permute.xlu0 %871
      %873 = vrot.lane.b32.xlu0 %v758, 64
      %v874 = vpop.permute.xlu0 %873
      %875 = vrot.lane.b32.xlu0 %v762, 64
      %v876 = vpop.permute.xlu0 %875
      %877 = vrot.lane.b32.xlu0 %v766, 64
      %v878 = vpop.permute.xlu0 %877
      %887 = vst.msk [vmem:[%s224 + $0x4] sm:$0x1] %vm726, %v864
      %888 = vst.msk [vmem:[%s224 + $0x14] sm:$0x1] %vm726, %v866
      %889 = vst.msk [vmem:[%s224 + $0x24] sm:$0x1] %vm726, %v868
      %890 = vst.msk [vmem:[%s224 + $0x34] sm:$0x1] %vm726, %v870
      %891 = vst.msk [vmem:[%s224 + $0x44] sm:$0x1] %vm726, %v872
      %892 = vst.msk [vmem:[%s224 + $0x54] sm:$0x1] %vm726, %v874
      %893 = vst.msk [vmem:[%s224 + $0x64] sm:$0x1] %vm726, %v876
      %894 = vst.msk [vmem:[%s224 + $0x74] sm:$0x1] %vm726, %v878
      %895 = vrot.lane.b32.xlu0 %v738, 48
      %v896 = vpop.permute.xlu0 %895
      %897 = vrot.lane.b32.xlu0 %v742, 48
      %v898 = vpop.permute.xlu0 %897
      %899 = vrot.lane.b32.xlu0 %v746, 48
      %v900 = vpop.permute.xlu0 %899
      %901 = vrot.lane.b32.xlu0 %v750, 48
      %v902 = vpop.permute.xlu0 %901
      %903 = vrot.lane.b32.xlu0 %v754, 48
      %v904 = vpop.permute.xlu0 %903
      %905 = vrot.lane.b32.xlu0 %v758, 48
      %v906 = vpop.permute.xlu0 %905
      %907 = vrot.lane.b32.xlu0 %v762, 48
      %v908 = vpop.permute.xlu0 %907
      %909 = vrot.lane.b32.xlu0 %v766, 48
      %v910 = vpop.permute.xlu0 %909
      %919 = vst.msk [vmem:[%s224 + $0x5] sm:$0x1] %vm726, %v896
      %920 = vst.msk [vmem:[%s224 + $0x15] sm:$0x1] %vm726, %v898
      %921 = vst.msk [vmem:[%s224 + $0x25] sm:$0x1] %vm726, %v900
      %922 = vst.msk [vmem:[%s224 + $0x35] sm:$0x1] %vm726, %v902
      %923 = vst.msk [vmem:[%s224 + $0x45] sm:$0x1] %vm726, %v904
      %924 = vst.msk [vmem:[%s224 + $0x55] sm:$0x1] %vm726, %v906
      %925 = vst.msk [vmem:[%s224 + $0x65] sm:$0x1] %vm726, %v908
      %926 = vst.msk [vmem:[%s224 + $0x75] sm:$0x1] %vm726, %v910
      %927 = vrot.lane.b32.xlu0 %v738, 32
      %v928 = vpop.permute.xlu0 %927
      %929 = vrot.lane.b32.xlu0 %v742, 32
      %v930 = vpop.permute.xlu0 %929
      %931 = vrot.lane.b32.xlu0 %v746, 32
      %v932 = vpop.permute.xlu0 %931
      %933 = vrot.lane.b32.xlu0 %v750, 32
      %v934 = vpop.permute.xlu0 %933
      %935 = vrot.lane.b32.xlu0 %v754, 32
      %v936 = vpop.permute.xlu0 %935
      %937 = vrot.lane.b32.xlu0 %v758, 32
      %v938 = vpop.permute.xlu0 %937
      %939 = vrot.lane.b32.xlu0 %v762, 32
      %v940 = vpop.permute.xlu0 %939
      %941 = vrot.lane.b32.xlu0 %v766, 32
      %v942 = vpop.permute.xlu0 %941
      %951 = vst.msk [vmem:[%s224 + $0x6] sm:$0x1] %vm726, %v928
      %952 = vst.msk [vmem:[%s224 + $0x16] sm:$0x1] %vm726, %v930
      %953 = vst.msk [vmem:[%s224 + $0x26] sm:$0x1] %vm726, %v932
      %954 = vst.msk [vmem:[%s224 + $0x36] sm:$0x1] %vm726, %v934
      %955 = vst.msk [vmem:[%s224 + $0x46] sm:$0x1] %vm726, %v936
      %956 = vst.msk [vmem:[%s224 + $0x56] sm:$0x1] %vm726, %v938
      %957 = vst.msk [vmem:[%s224 + $0x66] sm:$0x1] %vm726, %v940
      %958 = vst.msk [vmem:[%s224 + $0x76] sm:$0x1] %vm726, %v942
      %959 = vrot.lane.b32.xlu0 %v738, 16
      %v960 = vpop.permute.xlu0 %959
      %961 = vrot.lane.b32.xlu0 %v742, 16
      %v962 = vpop.permute.xlu0 %961
      %963 = vrot.lane.b32.xlu0 %v746, 16
      %v964 = vpop.permute.xlu0 %963
      %965 = vrot.lane.b32.xlu0 %v750, 16
      %v966 = vpop.permute.xlu0 %965
      %967 = vrot.lane.b32.xlu0 %v754, 16
      %v968 = vpop.permute.xlu0 %967
      %969 = vrot.lane.b32.xlu0 %v758, 16
      %v970 = vpop.permute.xlu0 %969
      %971 = vrot.lane.b32.xlu0 %v762, 16
      %v972 = vpop.permute.xlu0 %971
      %973 = vrot.lane.b32.xlu0 %v766, 16
      %v974 = vpop.permute.xlu0 %973
      %983 = vst.msk [vmem:[%s224 + $0x7] sm:$0x1] %vm726, %v960
      %984 = vst.msk [vmem:[%s224 + $0x17] sm:$0x1] %vm726, %v962
      %985 = vst.msk [vmem:[%s224 + $0x27] sm:$0x1] %vm726, %v964
      %986 = vst.msk [vmem:[%s224 + $0x37] sm:$0x1] %vm726, %v966
      %987 = vst.msk [vmem:[%s224 + $0x47] sm:$0x1] %vm726, %v968
      %988 = vst.msk [vmem:[%s224 + $0x57] sm:$0x1] %vm726, %v970
      %989 = vst.msk [vmem:[%s224 + $0x67] sm:$0x1] %vm726, %v972
      %990 = vst.msk [vmem:[%s224 + $0x77] sm:$0x1] %vm726, %v974
      %v992 = vcombine.high %v667, %v667
      %v994 = vunpack.c.l.s4 1966171168
      %v995 = vunpack.c.0.s8 %v994
      %v996 = vlaneseq
      %v997 = vshrl.u32 %v996, 7
      %v998 = vsub.s32 %v995, %v997
      %v999 = vrot.slane %v667, %v998
      %v1001 = vunpack.c.l.s4 1966171168
      %v1002 = vunpack.c.0.s8 %v1001
      %v1003 = vlaneseq
      %v1004 = vshrl.u32 %v1003, 7
      %v1005 = vsub.s32 %v1002, %v1004
      %v1006 = vrot.slane %v992, %v1005
      %v1007 = vcombine.high %v999, %v999
      %v1008 = vcombine.high %v1006, %v1006
      %v1010 = vunpack.c.l.s4 1966171168
      %v1011 = vunpack.c.0.s8 %v1010
      %v1012 = vlaneseq
      %v1013 = vshrl.u32 %v1012, 7
      %v1014 = vsub.s32 %v1011, %v1013
      %v1015 = vrot.slane %v999, %v1014
      %v1017 = vunpack.c.l.s4 1966171168
      %v1018 = vunpack.c.0.s8 %v1017
      %v1019 = vlaneseq
      %v1020 = vshrl.u32 %v1019, 7
      %v1021 = vsub.s32 %v1018, %v1020
      %v1022 = vrot.slane %v1006, %v1021
      %v1024 = vunpack.c.l.s4 1966171168
      %v1025 = vunpack.c.0.s8 %v1024
      %v1026 = vlaneseq
      %v1027 = vshrl.u32 %v1026, 7
      %v1028 = vsub.s32 %v1025, %v1027
      %v1029 = vrot.slane %v1007, %v1028
      %v1031 = vunpack.c.l.s4 1966171168
      %v1032 = vunpack.c.0.s8 %v1031
      %v1033 = vlaneseq
      %v1034 = vshrl.u32 %v1033, 7
      %v1035 = vsub.s32 %v1032, %v1034
      %v1036 = vrot.slane %v1008, %v1035
      %v1037 = vcombine.high %v1015, %v1015
      %v1038 = vcombine.high %v1022, %v1022
      %v1039 = vcombine.high %v1029, %v1029
      %v1040 = vcombine.high %v1036, %v1036
      %1049 = vst.msk [vmem:[%s224 + $0x8] sm:$0x1] %vm726, %v1015
      %1050 = vst.msk [vmem:[%s224 + $0x18] sm:$0x1] %vm726, %v1029
      %1051 = vst.msk [vmem:[%s224 + $0x28] sm:$0x1] %vm726, %v1037
      %1052 = vst.msk [vmem:[%s224 + $0x38] sm:$0x1] %vm726, %v1039
      %1053 = vst.msk [vmem:[%s224 + $0x48] sm:$0x1] %vm726, %v1022
      %1054 = vst.msk [vmem:[%s224 + $0x58] sm:$0x1] %vm726, %v1036
      %1055 = vst.msk [vmem:[%s224 + $0x68] sm:$0x1] %vm726, %v1038
      %1056 = vst.msk [vmem:[%s224 + $0x78] sm:$0x1] %vm726, %v1040
      %v1057 = vlaneseq
      %v1058 = vshrl.u32 %v1057, 7
      %v1059 = vsub.s32 0, %v1058
      %v1060 = vrot.slane %v1015, %v1059
      %v1061 = vlaneseq
      %v1062 = vshrl.u32 %v1061, 7
      %v1063 = vsub.s32 0, %v1062
      %v1064 = vrot.slane %v1029, %v1063
      %v1065 = vlaneseq
      %v1066 = vshrl.u32 %v1065, 7
      %v1067 = vsub.s32 0, %v1066
      %v1068 = vrot.slane %v1037, %v1067
      %v1069 = vlaneseq
      %v1070 = vshrl.u32 %v1069, 7
      %v1071 = vsub.s32 0, %v1070
      %v1072 = vrot.slane %v1039, %v1071
      %v1073 = vlaneseq
      %v1074 = vshrl.u32 %v1073, 7
      %v1075 = vsub.s32 0, %v1074
      %v1076 = vrot.slane %v1022, %v1075
      %v1077 = vlaneseq
      %v1078 = vshrl.u32 %v1077, 7
      %v1079 = vsub.s32 0, %v1078
      %v1080 = vrot.slane %v1036, %v1079
      %v1081 = vlaneseq
      %v1082 = vshrl.u32 %v1081, 7
      %v1083 = vsub.s32 0, %v1082
      %v1084 = vrot.slane %v1038, %v1083
      %v1085 = vlaneseq
      %v1086 = vshrl.u32 %v1085, 7
      %v1087 = vsub.s32 0, %v1086
      %v1088 = vrot.slane %v1040, %v1087
      %1089 = vrot.lane.b32.xlu0 %v1060, 112
      %v1090 = vpop.permute.xlu0 %1089
      %1091 = vrot.lane.b32.xlu0 %v1064, 112
      %v1092 = vpop.permute.xlu0 %1091
      %1093 = vrot.lane.b32.xlu0 %v1068, 112
      %v1094 = vpop.permute.xlu0 %1093
      %1095 = vrot.lane.b32.xlu0 %v1072, 112
      %v1096 = vpop.permute.xlu0 %1095
      %1097 = vrot.lane.b32.xlu0 %v1076, 112
      %v1098 = vpop.permute.xlu0 %1097
      %1099 = vrot.lane.b32.xlu0 %v1080, 112
      %v1100 = vpop.permute.xlu0 %1099
      %1101 = vrot.lane.b32.xlu0 %v1084, 112
      %v1102 = vpop.permute.xlu0 %1101
      %1103 = vrot.lane.b32.xlu0 %v1088, 112
      %v1104 = vpop.permute.xlu0 %1103
      %1113 = vst.msk [vmem:[%s224 + $0x9] sm:$0x1] %vm726, %v1090
      %1114 = vst.msk [vmem:[%s224 + $0x19] sm:$0x1] %vm726, %v1092
      %1115 = vst.msk [vmem:[%s224 + $0x29] sm:$0x1] %vm726, %v1094
      %1116 = vst.msk [vmem:[%s224 + $0x39] sm:$0x1] %vm726, %v1096
      %1117 = vst.msk [vmem:[%s224 + $0x49] sm:$0x1] %vm726, %v1098
      %1118 = vst.msk [vmem:[%s224 + $0x59] sm:$0x1] %vm726, %v1100
      %1119 = vst.msk [vmem:[%s224 + $0x69] sm:$0x1] %vm726, %v1102
      %1120 = vst.msk [vmem:[%s224 + $0x79] sm:$0x1] %vm726, %v1104
      %1121 = vrot.lane.b32.xlu0 %v1060, 96
      %v1122 = vpop.permute.xlu0 %1121
      %1123 = vrot.lane.b32.xlu0 %v1064, 96
      %v1124 = vpop.permute.xlu0 %1123
      %1125 = vrot.lane.b32.xlu0 %v1068, 96
      %v1126 = vpop.permute.xlu0 %1125
      %1127 = vrot.lane.b32.xlu0 %v1072, 96
      %v1128 = vpop.permute.xlu0 %1127
      %1129 = vrot.lane.b32.xlu0 %v1076, 96
      %v1130 = vpop.permute.xlu0 %1129
      %1131 = vrot.lane.b32.xlu0 %v1080, 96
      %v1132 = vpop.permute.xlu0 %1131
      %1133 = vrot.lane.b32.xlu0 %v1084, 96
      %v1134 = vpop.permute.xlu0 %1133
      %1135 = vrot.lane.b32.xlu0 %v1088, 96
      %v1136 = vpop.permute.xlu0 %1135
      %1145 = vst.msk [vmem:[%s224 + $0xa] sm:$0x1] %vm726, %v1122
      %1146 = vst.msk [vmem:[%s224 + $0x1a] sm:$0x1] %vm726, %v1124
      %1147 = vst.msk [vmem:[%s224 + $0x2a] sm:$0x1] %vm726, %v1126
      %1148 = vst.msk [vmem:[%s224 + $0x3a] sm:$0x1] %vm726, %v1128
      %1149 = vst.msk [vmem:[%s224 + $0x4a] sm:$0x1] %vm726, %v1130
      %1150 = vst.msk [vmem:[%s224 + $0x5a] sm:$0x1] %vm726, %v1132
      %1151 = vst.msk [vmem:[%s224 + $0x6a] sm:$0x1] %vm726, %v1134
      %1152 = vst.msk [vmem:[%s224 + $0x7a] sm:$0x1] %vm726, %v1136
      %1153 = vrot.lane.b32.xlu0 %v1060, 80
      %v1154 = vpop.permute.xlu0 %1153
      %1155 = vrot.lane.b32.xlu0 %v1064, 80
      %v1156 = vpop.permute.xlu0 %1155
      %1157 = vrot.lane.b32.xlu0 %v1068, 80
      %v1158 = vpop.permute.xlu0 %1157
      %1159 = vrot.lane.b32.xlu0 %v1072, 80
      %v1160 = vpop.permute.xlu0 %1159
      %1161 = vrot.lane.b32.xlu0 %v1076, 80
      %v1162 = vpop.permute.xlu0 %1161
      %1163 = vrot.lane.b32.xlu0 %v1080, 80
      %v1164 = vpop.permute.xlu0 %1163
      %1165 = vrot.lane.b32.xlu0 %v1084, 80
      %v1166 = vpop.permute.xlu0 %1165
      %1167 = vrot.lane.b32.xlu0 %v1088, 80
      %v1168 = vpop.permute.xlu0 %1167
      %1177 = vst.msk [vmem:[%s224 + $0xb] sm:$0x1] %vm726, %v1154
      %1178 = vst.msk [vmem:[%s224 + $0x1b] sm:$0x1] %vm726, %v1156
      %1179 = vst.msk [vmem:[%s224 + $0x2b] sm:$0x1] %vm726, %v1158
      %1180 = vst.msk [vmem:[%s224 + $0x3b] sm:$0x1] %vm726, %v1160
      %1181 = vst.msk [vmem:[%s224 + $0x4b] sm:$0x1] %vm726, %v1162
      %1182 = vst.msk [vmem:[%s224 + $0x5b] sm:$0x1] %vm726, %v1164
      %1183 = vst.msk [vmem:[%s224 + $0x6b] sm:$0x1] %vm726, %v1166
      %1184 = vst.msk [vmem:[%s224 + $0x7b] sm:$0x1] %vm726, %v1168
      %p1185 = scmp.lt.s32.totalorder %s16, 1
      %s1186 = scalar_select %p1185, %s16, 1
      %s1187 = smul.addr %s1186, 16
      %s1188 = smul.addr %s1187, 8
      %s1189 = scalar_lea.vmem %s5, %s1188
      // Predicated region
      $region41: #{unet_conv2_forward.1} parent=39 // pred_check
        %p1190 = pneg %p144
      $region42: #{unet_conv2_forward.1} parent=39 // pred_check_branch
        %1192 = sbr.rel (%p1190) target = $region44
      $region43: #{unet_conv2_forward.1} parent=39 // pred_region
        _
      $region44: #{unet_conv2_forward.1} parent=39 // pred_fallthru
        _
    $region40: #{unet_conv2_forward.1} parent=5 // pred_fallthru
      _
    %p1193 = scmp.le.s32.totalorder 2, %s11
    // Predicated region
    $region45: #{unet_conv2_forward.1} parent=5 // pred_check
      %p1194 = pneg %p1193
    $region46: #{unet_conv2_forward.1} parent=5 // pred_check_branch
      %1196 = sbr.rel (%p1194) target = $region48
    $region47: #{unet_conv2_forward.1} parent=5 // pred_region
      %s1197 = ssub.s32 %s11, 2
      // Predicated region
      $region49: #{unet_conv2_forward.1} parent=47 // pred_check
        %p1198 = pneg %p150
      $region50: #{unet_conv2_forward.1} parent=47 // pred_check_branch
        %1200 = sbr.rel (%p1198) target = $region52
      $region51: #{unet_conv2_forward.1} parent=47 // pred_region
        %p1201 = scmp.lt.s32.totalorder %s17, 1
        %s1202 = scalar_select %p1201, %s17, 1
        %s1203 = smul.addr %s1202, 16
        %s1204 = smul.addr %s1203, 8
        %s1205 = scalar_lea.vmem %s5, %s1204
      $region52: #{unet_conv2_forward.1} parent=47 // pred_fallthru
        _
    $region48: #{unet_conv2_forward.1} parent=5 // pred_fallthru
      _
  $region6: #{unet_conv2_forward.1} parent=0 // loop_footer
    %s15 = sadd.s32 1, %s11
  $region7: #{unet_conv2_forward.1} parent=0 // loop_footer_branch
    %10 = sbr.rel target = $region3
  $region8: #{unet_conv2_forward.1} parent=0 // loop_exit
    _

</llo_original>
